<compile_context>
chip_gen: v7x
topology: tpu7x:2x2x1
jax: 0.10.0
libtpu: 0.0.40
codegen_flags: <defaults>
</compile_context>

<pallas_src>
import jax
import jax.numpy as jnp
from jax.experimental import pallas as pl
from jax.experimental.pallas import tpu as pltpu


def _make_kernel(alpha, ln_bias, eps, dropout_rate):
    """Build a kernel specialized (at trace time) for the given scalar hyperparams."""
    use_dropout = dropout_rate > 0.0
    scale = 1.0 / (1.0 - dropout_rate) if use_dropout else 1.0
    # integer threshold: keep iff bits >= thr  =>  P(keep) = 1 - rate
    thr = min(int(dropout_rate * (1 << 32)), (1 << 32) - 1)

    def kernel(x_ref, w_ref, b_ref, *rest):
        if use_dropout:
            bits_ref, o_ref = rest
        else:
            (o_ref,) = rest

        x = x_ref[...]                                     # (TM, D) f32
        d = x.shape[-1]

        # --- LayerNormalisation (mean + unbiased std over last dim, torch.std) ---
        # NOTE: divides by (d - 1) and eps is added OUTSIDE the sqrt — matches the
        # reference module, intentionally different from nn.LayerNorm.
        mean = jnp.mean(x, axis=-1, keepdims=True)
        xc = x - mean
        var_unbiased = jnp.sum(xc * xc, axis=-1, keepdims=True) * (1.0 / (d - 1))
        std = jnp.sqrt(var_unbiased)
        y = (alpha * xc) / (std + eps) + ln_bias           # f32 stats/affine (v5e-safe)

        # --- sublayer: Linear(D -> D) on the MXU, bf16 operands, f32 accumulation ---
        z = jnp.dot(y.astype(jnp.bfloat16), w_ref[...],
                    preferred_element_type=jnp.float32) + b_ref[...]

        # --- dropout (only present in the traced kernel when rate > 0) ---
        if use_dropout:
            keep = bits_ref[...] >= jnp.uint32(thr)        # one u32 compare
            z = jnp.where(keep, z * scale, 0.0)            # one select + one mul

        # --- residual add ---
        o_ref[...] = (x + z).astype(o_ref.dtype)

    return kernel


def residual_connection(x, w, b, *, alpha=1.0, ln_bias=1.0, eps=1e-6,
                        dropout_rate=0.0, rng_key=None):
    if not (0.0 <= dropout_rate < 1.0):
        raise ValueError("dropout_rate must be in [0, 1) (rate=1 would divide by zero)")

    B, S, D = x.shape
    rows = B * S
    x2 = x.reshape(rows, D)

    # Fixed row tile (<= 512, multiple of 8) so the x/out tiles are double-buffered
    # and DMA overlaps compute; pad rows up to a tile multiple if needed.
    TM = min(512, -(-rows // 8) * 8)
    rows_p = -(-rows // TM) * TM
    if rows_p != rows:
        x2 = jnp.pad(x2, ((0, rows_p - rows), (0, 0)))

    use_dropout = dropout_rate > 0.0
    w_bf16 = w.astype(jnp.bfloat16)   # halves resident-weight VMEM/HBM footprint
    kernel = _make_kernel(float(alpha), float(ln_bias), float(eps), float(dropout_rate))

    in_specs = [
        pl.BlockSpec((TM, D), lambda i: (i, 0)),   # x row tile (pipelined)
        pl.BlockSpec((D, D), lambda i: (0, 0)),    # W, resident across the grid
        pl.BlockSpec((1, D), lambda i: (0, 0)),    # bias, resident
    ]
    args = [x2, w_bf16, b]
    if use_dropout:
        if rng_key is None:
            rng_key = jax.random.PRNGKey(0)
        bits = jax.random.bits(rng_key, (rows_p, D), dtype=jnp.uint32)
        in_specs.append(pl.BlockSpec((TM, D), lambda i: (i, 0)))
        args.append(bits)

    # Explicit VMEM budget: double-buffered streamed tiles + resident bf16 W + bias.
    # (Matters once D grows; keeps the same tiling valid on v7x's 64 MiB VMEM.)
    n_streams = 3 if use_dropout else 2           # x, out, (bits)
    vmem_bytes = 2 * n_streams * TM * D * 4 + D * D * 2 + D * 4
    vmem_limit = min(max(2 * vmem_bytes, 16 << 20), 100 << 20)

    out = pl.pallas_call(
        kernel,
        out_shape=jax.ShapeDtypeStruct((rows_p, D), x.dtype),
        grid_spec=pltpu.PrefetchScalarGridSpec(
            num_scalar_prefetch=0,
            grid=(rows_p // TM,),
            in_specs=in_specs,
            out_specs=pl.BlockSpec((TM, D), lambda i: (i, 0)),
        ),
        compiler_params=pltpu.CompilerParams(
            dimension_semantics=("parallel",),     # row tiles independent -> v7x dual-TC
            vmem_limit_bytes=vmem_limit,
        ),
    )(*args)

    if rows_p != rows:
        out = out[:rows]
    return out.reshape(B, S, D)


def _reference_no_dropout(x, w_bf16, b, alpha=1.0, ln_bias=1.0, eps=1e-6):
    mean = jnp.mean(x, axis=-1, keepdims=True)
    xc = x - mean
    var = jnp.sum(xc * xc, axis=-1, keepdims=True) / (x.shape[-1] - 1)
    std = jnp.sqrt(var)
    y = alpha * xc / (std + eps) + ln_bias
    z = jnp.einsum("bsd,de->bse", y.astype(jnp.bfloat16), w_bf16,
                   preferred_element_type=jnp.float32) + b[0]
    return x + z


if __name__ == "__main__":
    key = jax.random.PRNGKey(0)
    kx, kw, kb, kd = jax.random.split(key, 4)

    B, S, D = 2, 8, 128
    x = jax.random.normal(kx, (B, S, D), dtype=jnp.float32)
    # deterministic sublayer (Linear D->D) parameters
    w = jax.random.normal(kw, (D, D), dtype=jnp.float32) * (1.0 / jnp.sqrt(D))
    b = jax.random.normal(kb, (1, D), dtype=jnp.float32) * 0.01

    # correctness check with dropout disabled (deterministic path, no RNG in kernel)
    out0 = residual_connection(x, w, b, dropout_rate=0.0)
    jax.block_until_ready(out0)
    ref0 = _reference_no_dropout(x, w.astype(jnp.bfloat16), b)
    assert jnp.allclose(out0, ref0, atol=2e-3, rtol=2e-3), "mismatch vs reference"

    # training-mode run with dropout active (as in the PyTorch module)
    out1 = residual_connection(x, w, b, dropout_rate=0.1, rng_key=kd)
    jax.block_until_ready(out1)
    assert bool(jnp.all(jnp.isfinite(out1)))

    print("KERNEL_OK")
</pallas_src>

<mosaic_0001>
module attributes {stable_mosaic.version = 11 : i64} {
  func.func @kernel(%arg0: i32, %arg1: memref<16x128xf32, #tpu.memory_space<vmem>>, %arg2: memref<128x128xbf16, #tpu.memory_space<vmem>>, %arg3: memref<1x128xf32, #tpu.memory_space<vmem>>, %arg4: memref<16x128xf32, #tpu.memory_space<vmem>>) attributes {dimension_semantics = [#tpu.dimension_semantics<parallel>], iteration_bounds = array<i64: 1>, scalar_prefetch = 0 : i64, scratch_operands = 0 : i64, tpu.core_type = #tpu.core_type<tc>, window_params = [{transform_indices = @transform_0, window_bounds = array<i64: 16, 128>}, {pipeline_mode = #tpu.pipeline_mode<synchronous>, transform_indices = @transform_1, window_bounds = array<i64: 128, 128>}, {pipeline_mode = #tpu.pipeline_mode<synchronous>, transform_indices = @transform_2, window_bounds = array<i64: 1, 128>}, {transform_indices = @transform_3, window_bounds = array<i64: 16, 128>}]} {
    %c0 = arith.constant 0 : index
    %c0_0 = arith.constant 0 : index
    %0 = vector.load %arg1[%c0, %c0_0] : memref<16x128xf32, #tpu.memory_space<vmem>>, vector<16x128xf32>
    %cst = arith.constant dense<0.000000e+00> : vector<16xf32>
    %1 = vector.multi_reduction <add>, %0, %cst [1] : vector<16x128xf32> to vector<16xf32>
    %2 = vector.shape_cast %1 : vector<16xf32> to vector<16x1xf32>
    %cst_1 = arith.constant 1.280000e+02 : f32
    %3 = vector.broadcast %cst_1 : f32 to vector<16x1xf32>
    %4 = arith.divf %2, %3 : vector<16x1xf32>
    %5 = vector.broadcast %4 : vector<16x1xf32> to vector<16x128xf32>
    %6 = arith.subf %0, %5 : vector<16x128xf32>
    %7 = arith.mulf %6, %6 : vector<16x128xf32>
    %cst_2 = arith.constant dense<0.000000e+00> : vector<16xf32>
    %8 = vector.multi_reduction <add>, %7, %cst_2 [1] : vector<16x128xf32> to vector<16xf32>
    %9 = vector.shape_cast %8 : vector<16xf32> to vector<16x1xf32>
    %cst_3 = arith.constant 0.00787401571 : f32
    %10 = vector.broadcast %cst_3 : f32 to vector<16x1xf32>
    %11 = arith.mulf %9, %10 : vector<16x1xf32>
    %12 = math.sqrt %11 : vector<16x1xf32>
    %cst_4 = arith.constant 1.000000e+00 : f32
    %13 = vector.broadcast %cst_4 : f32 to vector<16x128xf32>
    %14 = arith.mulf %13, %6 : vector<16x128xf32>
    %cst_5 = arith.constant 9.99999997E-7 : f32
    %15 = vector.broadcast %cst_5 : f32 to vector<16x1xf32>
    %16 = arith.addf %12, %15 : vector<16x1xf32>
    %17 = vector.broadcast %16 : vector<16x1xf32> to vector<16x128xf32>
    %18 = arith.divf %14, %17 : vector<16x128xf32>
    %cst_6 = arith.constant 1.000000e+00 : f32
    %19 = vector.broadcast %cst_6 : f32 to vector<16x128xf32>
    %20 = arith.addf %18, %19 : vector<16x128xf32>
    %21 = arith.truncf %20 : vector<16x128xf32> to vector<16x128xbf16>
    %c0_7 = arith.constant 0 : index
    %c0_8 = arith.constant 0 : index
    %22 = vector.load %arg2[%c0_7, %c0_8] : memref<128x128xbf16, #tpu.memory_space<vmem>>, vector<128x128xbf16>
    %cst_9 = arith.constant dense<0.000000e+00> : vector<16x128xf32>
    %23 = tpu.matmul %21, %22, %cst_9 {dimension_numbers = #tpu.dot_dimension_numbers<[1], [0], [0], [1], [0, 0, 1, 1], [], []>} : vector<16x128xbf16>, vector<128x128xbf16>, vector<16x128xf32> -> vector<16x128xf32>
    %c0_10 = arith.constant 0 : index
    %c0_11 = arith.constant 0 : index
    %24 = vector.load %arg3[%c0_10, %c0_11] : memref<1x128xf32, #tpu.memory_space<vmem>>, vector<1x128xf32>
    %25 = vector.broadcast %24 : vector<1x128xf32> to vector<16x128xf32>
    %26 = arith.addf %23, %25 : vector<16x128xf32>
    %27 = arith.addf %0, %26 : vector<16x128xf32>
    %c0_12 = arith.constant 0 : index
    %c0_13 = arith.constant 0 : index
    %28 = vector.load %arg4[%c0_12, %c0_13] : memref<16x128xf32, #tpu.memory_space<vmem>>, vector<16x128xf32>
    tpu.vector_store %arg4[%c0_12, %c0_13], %27 {strides = array<i32>} : memref<16x128xf32, #tpu.memory_space<vmem>>, vector<16x128xf32>,
    return
  }
  func.func @transform_0(%arg0: i32) -> (i32, i32) {
    %c0_i32 = arith.constant 0 : i32
    %c0_i32_0 = arith.constant 0 : i32
    return %arg0, %c0_i32 : i32, i32
  }
  func.func @transform_1(%arg0: i32) -> (i32, i32) {
    %c0_i32 = arith.constant 0 : i32
    %c0_i32_0 = arith.constant 0 : i32
    %c0_i32_1 = arith.constant 0 : i32
    return %c0_i32, %c0_i32_0 : i32, i32
  }
  func.func @transform_2(%arg0: i32) -> (i32, i32) {
    %c0_i32 = arith.constant 0 : i32
    %c0_i32_0 = arith.constant 0 : i32
    %c0_i32_1 = arith.constant 0 : i32
    return %c0_i32, %c0_i32_0 : i32, i32
  }
  func.func @transform_3(%arg0: i32) -> (i32, i32) {
    %c0_i32 = arith.constant 0 : i32
    %c0_i32_0 = arith.constant 0 : i32
    return %arg0, %c0_i32 : i32, i32
  }
}

</mosaic_0001>

<llo_original>
// kernel: tpu_custom_call.1
$region0: #{tpu_custom_call.1}
  #allocation0 [shape = 'u32[]', space=smem, size = 0x4, offset = 0x4, fixed_abs, tag = 'smem constant byte address 0x4 - core index']
  #allocation1 [shape = 'u32[144,128]{1,0:T(1,128)}', space=vmem, size = 0x12000, scoped, tag = 'internal scratch']
  %s0 = inlined_call_operand.hbm [shape: f32[16,128], index: 0, kind: input, shape index: {}]
  %s1 = inlined_call_operand.hbm [shape: bf16[128,128], index: 1, kind: input, shape index: {}]
  %s2 = inlined_call_operand.vmem [shape: f32[1,128], index: 2, kind: input, shape index: {}]
  %s3 = inlined_call_operand.hbm [shape: f32[16,128], index: 3, kind: output, shape index: {}]
  %s4 = sld [smem:[#allocation0]]
  $region30: #{tpu_custom_call.1} parent=0
    _
  %s6 = ssub.s32 1, %s4
  %s7 = scalar_select 0, %s6, %s4
  $region1: #{tpu_custom_call.1} parent=0
    #allocation2 [shape = 'u8[8192]{0}', space=vmem, size = 0x2000, scoped, tag = 'input window, operand 0, single buffered']
    #allocation3 [shape = 's32[1]{0}', space=sflag, size = 0x4, scoped, tag = 'scoped memory for tpu_custom_call.1']
    #allocation4 [shape = 's32[1]{0}', space=sflag, size = 0x4, scoped, tag = 'scoped memory for tpu_custom_call.1']
    #allocation5 [shape = 'u8[32768]{0}', space=vmem, size = 0x8000, scoped, tag = 'input window, operand 1, single buffered']
    #allocation6 [shape = 's32[1]{0}', space=sflag, size = 0x4, scoped, tag = 'scoped memory for tpu_custom_call.1']
    #allocation7 [shape = 'u8[8192]{0}', space=vmem, size = 0x2000, scoped, tag = 'output window, operand 0, single buffered']
    %8 = vsyncpa [#allocation3], 0
    %9 = vsyncpa [#allocation6], 0
    %10 = vsyncpa [#allocation4], 0
    // Predicated region
    $region2: #{tpu_custom_call.1} parent=1 // pred_check
      _
    $region3: #{tpu_custom_call.1} parent=1 // pred_check_branch
      %12 = sbr.rel (0) target = $region5
    $region4: #{tpu_custom_call.1} parent=1 // pred_region
      %s14 = ssub.s32 256, 256
      %15 = vsyncadd [#allocation3], %s14
      %s16 = sshll.u32 [#allocation2], 4
      %s17 = int_to_ptr.vmem [resolvable:$true] %s16
      %22 = dma.hbm_to_vmem [thread:$0]  %s0, 256, %s17, [#allocation3], 128, 128, 8
    $region5: #{tpu_custom_call.1} parent=1 // pred_fallthru
      _
    // Predicated region
    $region6: #{tpu_custom_call.1} parent=1 // pred_check
      _
    $region7: #{tpu_custom_call.1} parent=1 // pred_check_branch
      %24 = sbr.rel (0) target = $region9
    $region8: #{tpu_custom_call.1} parent=1 // pred_region
      %s26 = ssub.s32 1024, 1024
      %27 = vsyncadd [#allocation6], %s26
      %s28 = sshll.u32 [#allocation5], 4
      %s29 = int_to_ptr.vmem [resolvable:$true] %s28
      %34 = dma.hbm_to_vmem [thread:$0]  %s1, 1024, %s29, [#allocation6], 64, 64, 4
    $region9: #{tpu_custom_call.1} parent=1 // pred_fallthru
      _
    // Predicated region
    $region10: #{tpu_custom_call.1} parent=1 // pred_check
      _
    $region11: #{tpu_custom_call.1} parent=1 // pred_check_branch
      %36 = sbr.rel (0) target = $region13
    $region12: #{tpu_custom_call.1} parent=1 // pred_region
      _
    $region13: #{tpu_custom_call.1} parent=1 // pred_fallthru
      _
    // Predicated region
    $region14: #{tpu_custom_call.1} parent=1 // pred_check
      _
    $region15: #{tpu_custom_call.1} parent=1 // pred_check_branch
      %38 = sbr.rel (0) target = $region17
    $region16: #{tpu_custom_call.1} parent=1 // pred_region
      %39 = dma.done [#allocation3], 256
    $region17: #{tpu_custom_call.1} parent=1 // pred_fallthru
      _
    // Predicated region
    $region18: #{tpu_custom_call.1} parent=1 // pred_check
      _
    $region19: #{tpu_custom_call.1} parent=1 // pred_check_branch
      %41 = sbr.rel (0) target = $region21
    $region20: #{tpu_custom_call.1} parent=1 // pred_region
      %42 = dma.done [#allocation6], 1024
    $region21: #{tpu_custom_call.1} parent=1 // pred_fallthru
      _
    %v44 = vld [vmem:[#allocation2] sm:$0xff]
    %v45 = vld [vmem:[#allocation2 + $0x8] sm:$0xff]
    %46 = vadd.xlane.f32.xlu0 %v44
    %v47 = vpop.xlane.xlu0 %46
    %48 = vadd.xlane.f32.xlu0 %v45
    %v49 = vpop.xlane.xlu0 %48
    %v50 = vrcp.pop 128.0
    %v51 = vmul.f32 %v47, %v50
    %v52 = vmul.f32 %v49, %v50
    %v53 = vsub.f32 %v44, %v51
    %v54 = vsub.f32 %v45, %v52
    %v55 = vmul.f32 %v53, %v53
    %v56 = vmul.f32 %v54, %v54
    %57 = vadd.xlane.f32.xlu0 %v55
    %v58 = vpop.xlane.xlu0 %57
    %59 = vadd.xlane.f32.xlu0 %v56
    %v60 = vpop.xlane.xlu0 %59
    %v61 = vmul.f32 %v58, 0.007874016
    %v62 = vmul.f32 %v60, 0.007874016
    %v63 = vrsqrt.pop %v61
    %v64 = vmul.f32 %v61, %v63
    %vm65 = vcmp.eq.f32.partialorder %v61, inf
    %v66 = vsel %vm65, %v61, %v64
    %vm67 = vcmp.eq.f32.partialorder %v61, 0.0
    %v68 = vand.u32 %v61, 2147483648
    %v69 = vsel %vm67, %v68, %v66
    %v70 = vrsqrt.pop %v62
    %v71 = vmul.f32 %v62, %v70
    %vm72 = vcmp.eq.f32.partialorder %v62, inf
    %v73 = vsel %vm72, %v62, %v71
    %vm74 = vcmp.eq.f32.partialorder %v62, 0.0
    %v75 = vand.u32 %v62, 2147483648
    %v76 = vsel %vm74, %v75, %v73
    %v77 = vadd.f32 %v69, 1e-06
    %v78 = vadd.f32 %v76, 1e-06
    %v79 = vrcp.pop %v77
    %v80 = vmul.f32 %v53, %v79
    %v81 = vrcp.pop %v78
    %v82 = vmul.f32 %v54, %v81
    %v83 = vadd.f32 %v80, 1.0
    %v84 = vadd.f32 %v82, 1.0
    %v85 = vpack.c.bf16 %v84, %v83
    %v86 = vld [vmem:[#allocation5] sm:$0xf]
    %v87 = vld [vmem:[#allocation5 + $0x4] sm:$0xf]
    %v88 = vld [vmem:[#allocation5 + $0x8] sm:$0xf]
    %v89 = vld [vmem:[#allocation5 + $0xc] sm:$0xf]
    %v90 = vld [vmem:[#allocation5 + $0x10] sm:$0xf]
    %v91 = vld [vmem:[#allocation5 + $0x14] sm:$0xf]
    %v92 = vld [vmem:[#allocation5 + $0x18] sm:$0xf]
    %v93 = vld [vmem:[#allocation5 + $0x1c] sm:$0xf]
    %v94 = vld [vmem:[#allocation5 + $0x20] sm:$0xf]
    %v95 = vld [vmem:[#allocation5 + $0x24] sm:$0xf]
    %v96 = vld [vmem:[#allocation5 + $0x28] sm:$0xf]
    %v97 = vld [vmem:[#allocation5 + $0x2c] sm:$0xf]
    %v98 = vld [vmem:[#allocation5 + $0x30] sm:$0xf]
    %v99 = vld [vmem:[#allocation5 + $0x34] sm:$0xf]
    %v100 = vld [vmem:[#allocation5 + $0x38] sm:$0xf]
    %v101 = vld [vmem:[#allocation5 + $0x3c] sm:$0xf]
    %v102 = vld [vmem:[%s2] sm:$0x1]
    %v104 = vlaneseq
    %v105 = vshrl.u32 %v104, 7
    %v106 = vsub.s32 0, %v105
    %v107 = vrot.slane %v102, %v106
    %v125 = vunpack.c.l.b16 %v86
    %v126 = vunpack.c.l.b16 %v87
    %v127 = vunpack.c.l.b16 %v88
    %v128 = vunpack.c.l.b16 %v89
    %v129 = vunpack.c.l.b16 %v90
    %v130 = vunpack.c.l.b16 %v91
    %v131 = vunpack.c.l.b16 %v92
    %v132 = vunpack.c.l.b16 %v93
    %v133 = vunpack.c.l.b16 %v94
    %v134 = vunpack.c.l.b16 %v95
    %v135 = vunpack.c.l.b16 %v96
    %v136 = vunpack.c.l.b16 %v97
    %v137 = vunpack.c.l.b16 %v98
    %v138 = vunpack.c.l.b16 %v99
    %v139 = vunpack.c.l.b16 %v100
    %v140 = vunpack.c.l.b16 %v101
    %v141 = vpack.c.b16 %v126, %v125
    %v142 = vpack.c.b16 %v128, %v127
    %v143 = vpack.c.b16 %v130, %v129
    %v144 = vpack.c.b16 %v132, %v131
    %v145 = vpack.c.b16 %v134, %v133
    %v146 = vpack.c.b16 %v136, %v135
    %v147 = vpack.c.b16 %v138, %v137
    %v148 = vpack.c.b16 %v140, %v139
    %157 = vmatprep.subr.bf16.mxu0 0
    %158 = vmatpush1.bf16.msra.mxu0 %v141
    %159 = vmatprep.subr.bf16.mxu0 0
    %160 = vmatpush1.bf16.msra.mxu0 %v142
    %161 = vmatprep.subr.bf16.mxu0 0
    %162 = vmatpush1.bf16.msra.mxu0 %v143
    %163 = vmatprep.subr.bf16.mxu0 0
    %164 = vmatpush1.bf16.msra.mxu0 %v144
    %165 = vmatprep.subr.bf16.mxu0 0
    %166 = vmatpush1.bf16.msra.mxu0 %v145
    %167 = vmatprep.subr.bf16.mxu0 0
    %168 = vmatpush1.bf16.msra.mxu0 %v146
    %169 = vmatprep.subr.bf16.mxu0 0
    %170 = vmatpush1.bf16.msra.mxu0 %v147
    %171 = vmatprep.subr.bf16.mxu0 0
    %172 = vmatpush1.bf16.msra.mxu0 %v148
    %173 = vmatprep.subr.bf16.mxu0 0
    %174 = vmatpush1.bf16.msra.mxu0 0
    %175 = vmatprep.subr.bf16.mxu0 0
    %176 = vmatpush1.bf16.msra.mxu0 0
    %177 = vmatprep.subr.bf16.mxu0 0
    %178 = vmatpush1.bf16.msra.mxu0 0
    %179 = vmatprep.subr.bf16.mxu0 0
    %180 = vmatpush1.bf16.msra.mxu0 0
    %181 = vmatprep.subr.bf16.mxu0 0
    %182 = vmatpush1.bf16.msra.mxu0 0
    %183 = vmatprep.subr.bf16.mxu0 0
    %184 = vmatpush1.bf16.msra.mxu0 0
    %185 = vmatprep.subr.bf16.mxu0 0
    %186 = vmatpush1.bf16.msra.mxu0 0
    %187 = vmatprep.subr.bf16.mxu0 0
    %188 = vmatpush1.bf16.msra.mxu0 0
    %189 = vmatprep.mubr.bf16.mxu0 0
    %190 = vmatmul.mubr.bf16.gmra.mrb[0].mxu0 %v85
    %v191 = vpop.f32.mrb[0].mxu0
    %v192 = vadd.f32 %v107, %v191
    %v193 = vpop.f32.mrb[0].mxu0
    %v194 = vpop.f32.mrb[0].mxu0
    %v195 = vadd.f32 %v107, %v194
    %v196 = vpop.f32.mrb[0].mxu0
    %197 = vdwg.mxu0
    %v198 = vadd.f32 %v44, %v192
    %v199 = vadd.f32 %v45, %v195
    %200 = vst [vmem:[#allocation7] sm:$0xff] %v198
    %201 = vst [vmem:[#allocation7 + $0x8] sm:$0xff] %v199
    // Predicated region
    $region22: #{tpu_custom_call.1} parent=1 // pred_check
      _
    $region23: #{tpu_custom_call.1} parent=1 // pred_check_branch
      %203 = sbr.rel (0) target = $region25
    $region24: #{tpu_custom_call.1} parent=1 // pred_region
      %s205 = ssub.s32 256, 256
      %206 = vsyncadd [#allocation4], %s205
      %s207 = sshll.u32 [#allocation7], 4
      %s208 = int_to_ptr.vmem [resolvable:$true] %s207
      %213 = dma.vmem_to_hbm [thread:$0]  %s208, 256, %s3, [#allocation4], 128, 128, 8
    $region25: #{tpu_custom_call.1} parent=1 // pred_fallthru
      _
    // Predicated region
    $region26: #{tpu_custom_call.1} parent=1 // pred_check
      _
    $region27: #{tpu_custom_call.1} parent=1 // pred_check_branch
      %215 = sbr.rel (0) target = $region29
    $region28: #{tpu_custom_call.1} parent=1 // pred_region
      %216 = dma.done [#allocation4], 256
    $region29: #{tpu_custom_call.1} parent=1 // pred_fallthru
      _
    %217 = vsyncpa [#allocation3], 1
    %218 = vsyncpa [#allocation6], 1
    %219 = vsyncpa [#allocation4], 1

</llo_original>
